<compile_context>
chip_gen: v6e
topology: v6e:2x2x1
jax: 0.10.0
libtpu: 0.0.40
codegen_flags: <defaults>
</compile_context>

<pallas_src>
import numpy as np
import jax
import jax.numpy as jnp
from jax.experimental import pallas as pl
from jax.experimental.pallas import tpu as pltpu


def _sinusoidal_kernel(x_ref, fsel_ref, phase_ref, out_ref):
    # x_ref:     (TR, pack)  f32 -- `pack` batch elements per packed output row
    # fsel_ref:  (pack, W)   f32 -- row p holds [freqs | freqs] in lanes
    #                               [p*D, (p+1)*D) and exact 0.0 elsewhere
    # phase_ref: (1, W)      f32 -- tiled [0]*half + [pi/2]*half
    # out_ref:   (TR, W)     f32 -- lane-dense packed [sin | cos] rows
    x = x_ref[...]
    fsel = fsel_ref[...]
    pack = fsel.shape[0]
    # Expand x across all W lanes and apply its frequency in one shot: each lane
    # gets exactly one nonzero product (exact f32 x*f); the other terms add 0.
    arg = x[:, 0:1] * fsel[0:1, :]
    for p in range(1, pack):
        arg = arg + x[:, p : p + 1] * fsel[p : p + 1, :]
    arg = arg + phase_ref[...]            # cos(t) == sin(t + pi/2)
    out_ref[...] = jnp.sin(arg)           # single full-width transcendental pass


_LANES = 128
_MAX_BLOCK_ROWS = 4096   # 4096 x 128 x f32 = 2 MiB per output block (x2 buffers)
_MAX_PACK = 16           # cap the unrolled per-row expansion


def _packing_factor(D):
    if D <= _LANES and _LANES % D == 0:
        return min(_LANES // D, _MAX_PACK)
    return 1


@jax.jit
def sinusoidal_embedding(x, freqs):
    """x: (B,) or (B, 1) float32, freqs: (D//2,) float32 -> (B, D) float32."""
    x = jnp.asarray(x, jnp.float32).reshape(-1)            # (B,)
    freqs = jnp.asarray(freqs, jnp.float32).reshape(-1)    # (half,)
    B = x.shape[0]
    half = freqs.shape[0]
    D = 2 * half

    pack = _packing_factor(D)
    W = pack * D                                           # packed row width (lanes)
    rows = pl.cdiv(B, pack)
    if rows <= _MAX_BLOCK_ROWS:
        block_rows, rows_padded = rows, rows               # one block = full array
    else:
        block_rows = _MAX_BLOCK_ROWS
        rows_padded = pl.cdiv(rows, block_rows) * block_rows
    grid = (rows_padded // block_rows,)

    # Pack `pack` consecutive x values per row (tail padded; padded rows are
    # computed and then discarded by the final slice).
    total = rows_padded * pack
    if total != B:
        x = jnp.pad(x, (0, total - B))
    x_packed = x.reshape(rows_padded, pack)

    # Constants: DMA'd once, kept resident across the grid (constant index_map).
    freqs2 = jnp.concatenate([freqs, freqs])                               # (D,)
    fsel = (jnp.eye(pack, dtype=jnp.float32)[:, :, None]
            * freqs2[None, None, :]).reshape(pack, W)                      # (pack, W)
    phase = jnp.tile(
        jnp.concatenate([jnp.zeros((half,), jnp.float32),
                         jnp.full((half,), jnp.pi / 2, jnp.float32)]),
        pack,
    ).reshape(1, W)                                                        # (1, W)

    cost = pl.CostEstimate(
        flops=rows_padded * W * (2 * pack + 2),
        transcendentals=rows_padded * W,
        bytes_accessed=4 * (rows_padded * pack + pack * W + W + rows_padded * W),
    )

    out_packed = pl.pallas_call(
        _sinusoidal_kernel,
        out_shape=jax.ShapeDtypeStruct((rows_padded, W), jnp.float32),
        grid=grid,
        in_specs=[
            pl.BlockSpec((block_rows, pack), lambda i: (i, 0)),
            pl.BlockSpec((pack, W), lambda i: (0, 0)),      # resident constant
            pl.BlockSpec((1, W), lambda i: (0, 0)),         # resident constant
        ],
        out_specs=pl.BlockSpec((block_rows, W), lambda i: (i, 0)),
        compiler_params=pltpu.CompilerParams(dimension_semantics=("parallel",)),
        cost_estimate=cost,
    )(x_packed, fsel, phase)

    # Free unpack: (rows_padded, pack*D) -> (rows_padded*pack, D), same bytes.
    out = out_packed.reshape(rows_padded * pack, D)
    if total != B:
        out = out[:B]
    return out


def make_freqs(embedding_dim, min_frequency=1.0, max_frequency=1000.0):
    # Deterministic buffer init, matching the PyTorch __init__.
    half = embedding_dim // 2
    f = np.exp(np.linspace(np.log(min_frequency), np.log(max_frequency), half))
    return jnp.asarray(f * 2.0 * np.pi, dtype=jnp.float32)


if __name__ == "__main__":
    B = 8
    embedding_dim = 32

    key = jax.random.PRNGKey(0)
    x = jax.random.uniform(key, (B, 1), dtype=jnp.float32)   # e.g. noise levels in [0, 1)
    freqs = make_freqs(embedding_dim)

    out = jax.block_until_ready(sinusoidal_embedding(x, freqs))
    assert out.shape == (B, embedding_dim)

    # float64 reference (same math as the PyTorch forward).  Tolerance reflects
    # f32 argument rounding: args reach 2*pi*1000 ~ 6.3e3 where one f32 ulp is
    # ~5e-4, so ANY f32 evaluation (including the naive sin/cos one) carries a
    # few e-4 of intrinsic error; 2e-3 gives ample margin.
    x64 = np.asarray(x, np.float64).reshape(-1, 1)
    f64 = np.asarray(freqs, np.float64)[None, :]
    ref = np.concatenate([np.sin(f64 * x64), np.cos(f64 * x64)], axis=-1)
    np.testing.assert_allclose(np.asarray(out, np.float64), ref, atol=2e-3, rtol=0)

    print("KERNEL_OK")
</pallas_src>

<mosaic_0001>
module attributes {stable_mosaic.version = 11 : i64} {
  func.func @_sinusoidal_kernel(%arg0: i32, %arg1: memref<2x4xf32, #tpu.memory_space<vmem>>, %arg2: memref<4x128xf32, #tpu.memory_space<vmem>>, %arg3: memref<1x128xf32, #tpu.memory_space<vmem>>, %arg4: memref<2x128xf32, #tpu.memory_space<vmem>>) attributes {dimension_semantics = [#tpu.dimension_semantics<parallel>], iteration_bounds = array<i64: 1>, scalar_prefetch = 0 : i64, scratch_operands = 0 : i64, tpu.core_type = #tpu.core_type<tc>, window_params = [{transform_indices = @transform_0, window_bounds = array<i64: 2, 4>}, {pipeline_mode = #tpu.pipeline_mode<synchronous>, transform_indices = @transform_1, window_bounds = array<i64: 4, 128>}, {pipeline_mode = #tpu.pipeline_mode<synchronous>, transform_indices = @transform_2, window_bounds = array<i64: 1, 128>}, {transform_indices = @transform_3, window_bounds = array<i64: 2, 128>}]} {
    %c0 = arith.constant 0 : index
    %c0_0 = arith.constant 0 : index
    %0 = vector.load %arg1[%c0, %c0_0] : memref<2x4xf32, #tpu.memory_space<vmem>>, vector<2x4xf32>
    %c0_1 = arith.constant 0 : index
    %c0_2 = arith.constant 0 : index
    %1 = vector.load %arg2[%c0_1, %c0_2] : memref<4x128xf32, #tpu.memory_space<vmem>>, vector<4x128xf32>
    %2 = vector.extract_strided_slice %0 {offsets = [0, 0], sizes = [2, 1], strides = [1, 1]} : vector<2x4xf32> to vector<2x1xf32>
    %3 = vector.extract_strided_slice %1 {offsets = [0, 0], sizes = [1, 128], strides = [1, 1]} : vector<4x128xf32> to vector<1x128xf32>
    %4 = vector.broadcast %2 : vector<2x1xf32> to vector<2x128xf32>
    %5 = vector.broadcast %3 : vector<1x128xf32> to vector<2x128xf32>
    %6 = arith.mulf %4, %5 : vector<2x128xf32>
    %7 = vector.extract_strided_slice %0 {offsets = [0, 1], sizes = [2, 1], strides = [1, 1]} : vector<2x4xf32> to vector<2x1xf32>
    %8 = vector.extract_strided_slice %1 {offsets = [1, 0], sizes = [1, 128], strides = [1, 1]} : vector<4x128xf32> to vector<1x128xf32>
    %9 = vector.broadcast %7 : vector<2x1xf32> to vector<2x128xf32>
    %10 = vector.broadcast %8 : vector<1x128xf32> to vector<2x128xf32>
    %11 = arith.mulf %9, %10 : vector<2x128xf32>
    %12 = arith.addf %6, %11 : vector<2x128xf32>
    %13 = vector.extract_strided_slice %0 {offsets = [0, 2], sizes = [2, 1], strides = [1, 1]} : vector<2x4xf32> to vector<2x1xf32>
    %14 = vector.extract_strided_slice %1 {offsets = [2, 0], sizes = [1, 128], strides = [1, 1]} : vector<4x128xf32> to vector<1x128xf32>
    %15 = vector.broadcast %13 : vector<2x1xf32> to vector<2x128xf32>
    %16 = vector.broadcast %14 : vector<1x128xf32> to vector<2x128xf32>
    %17 = arith.mulf %15, %16 : vector<2x128xf32>
    %18 = arith.addf %12, %17 : vector<2x128xf32>
    %19 = vector.extract_strided_slice %0 {offsets = [0, 3], sizes = [2, 1], strides = [1, 1]} : vector<2x4xf32> to vector<2x1xf32>
    %20 = vector.extract_strided_slice %1 {offsets = [3, 0], sizes = [1, 128], strides = [1, 1]} : vector<4x128xf32> to vector<1x128xf32>
    %21 = vector.broadcast %19 : vector<2x1xf32> to vector<2x128xf32>
    %22 = vector.broadcast %20 : vector<1x128xf32> to vector<2x128xf32>
    %23 = arith.mulf %21, %22 : vector<2x128xf32>
    %24 = arith.addf %18, %23 : vector<2x128xf32>
    %c0_3 = arith.constant 0 : index
    %c0_4 = arith.constant 0 : index
    %25 = vector.load %arg3[%c0_3, %c0_4] : memref<1x128xf32, #tpu.memory_space<vmem>>, vector<1x128xf32>
    %26 = vector.broadcast %25 : vector<1x128xf32> to vector<2x128xf32>
    %27 = arith.addf %24, %26 : vector<2x128xf32>
    %28 = math.sin %27 : vector<2x128xf32>
    %c0_5 = arith.constant 0 : index
    %c0_6 = arith.constant 0 : index
    %29 = vector.load %arg4[%c0_5, %c0_6] : memref<2x128xf32, #tpu.memory_space<vmem>>, vector<2x128xf32>
    tpu.vector_store %arg4[%c0_5, %c0_6], %28 {strides = array<i32>} : memref<2x128xf32, #tpu.memory_space<vmem>>, vector<2x128xf32>,
    return
  }
  func.func @transform_0(%arg0: i32) -> (i32, i32) {
    %c0_i32 = arith.constant 0 : i32
    %c0_i32_0 = arith.constant 0 : i32
    return %arg0, %c0_i32 : i32, i32
  }
  func.func @transform_1(%arg0: i32) -> (i32, i32) {
    %c0_i32 = arith.constant 0 : i32
    %c0_i32_0 = arith.constant 0 : i32
    %c0_i32_1 = arith.constant 0 : i32
    return %c0_i32, %c0_i32_0 : i32, i32
  }
  func.func @transform_2(%arg0: i32) -> (i32, i32) {
    %c0_i32 = arith.constant 0 : i32
    %c0_i32_0 = arith.constant 0 : i32
    %c0_i32_1 = arith.constant 0 : i32
    return %c0_i32, %c0_i32_0 : i32, i32
  }
  func.func @transform_3(%arg0: i32) -> (i32, i32) {
    %c0_i32 = arith.constant 0 : i32
    %c0_i32_0 = arith.constant 0 : i32
    return %arg0, %c0_i32 : i32, i32
  }
}

</mosaic_0001>

<llo_original>
// kernel: tile.7
$region0: #{tile.7}
  %s0 = inlined_call_operand.vmem [shape: f32[4,32], index: 0, kind: input, shape index: {}]
  %s1 = inlined_call_operand.vmem [shape: f32[1,128], index: 1, kind: output, shape index: {}]
  $region1: #{tile.7} parent=0
    #allocation0 [shape = 'u8[4096]{0}', space=vmem, size = 0x1000, scoped, tag = 'scoped mem for output reshape']
    #allocation1 [shape = 'u8[4096]{0}', space=vmem, size = 0x1000, scoped, tag = 'scoped mem for input reshape']
    %s3 = sshll.u32 1, 4
    %s4 = ssub.s32 %s3, 1
    %v5 = vld [vmem:[%s0] sm:%s4]
    %6 = vst [vmem:[#allocation1] sm:%s4] %v5
    %v7 = vld [vmem:[#allocation1] sm:$0x1]
    %vm8 = vcmask 261120
    %9 = vst.msk [vmem:[#allocation0] sm:$0x1] %vm8, %v7
    %s10 = scalar_lea.vmem [#allocation1], 3
    %v11 = vld [vmem:[%s10] sm:$0x1]
    %12 = vrot.lane.b32.xlu0 %v11, 96
    %v13 = vpop.permute.xlu0 %12
    %vm14 = vcmask 1048320
    %15 = vst.msk [vmem:[#allocation0] sm:$0x1] %vm14, %v13
    %s16 = scalar_lea.vmem [#allocation1], 2
    %v17 = vld [vmem:[%s16] sm:$0x1]
    %18 = vrot.lane.b32.xlu0 %v17, 64
    %v19 = vpop.permute.xlu0 %18
    %vm20 = vcmask 785920
    %21 = vst.msk [vmem:[#allocation0] sm:$0x1] %vm20, %v19
    %s22 = scalar_lea.vmem [#allocation1], 1
    %v23 = vld [vmem:[%s22] sm:$0x1]
    %24 = vrot.lane.b32.xlu0 %v23, 32
    %v25 = vpop.permute.xlu0 %24
    %vm26 = vcmask 523520
    %27 = vst.msk [vmem:[#allocation0] sm:$0x1] %vm26, %v25
    %s29 = sshll.u32 1, 1
    %s30 = ssub.s32 %s29, 1
    %v32 = vld [vmem:[#allocation0] sm:%s30]
    %s33 = sshll.u32 1, 1
    %s34 = ssub.s32 %s33, 1
    %35 = vst [vmem:[%s1] sm:%s34] %v32

// kernel: sinusoidal_embedding.1
$region0: #{sinusoidal_embedding.1}
  #allocation0 [shape = 'u32[]', space=smem, size = 0x4, offset = 0x4, fixed_abs, tag = 'smem constant byte address 0x4 - core index']
  #allocation1 [shape = 'u32[144,128]{1,0:T(1,128)}', space=vmem, size = 0x12000, scoped, tag = 'internal scratch']
  %s0 = inlined_call_operand.vmem [shape: f32[2,4], index: 0, kind: input, shape index: {}]
  %s1 = inlined_call_operand.vmem [shape: f32[4,128], index: 1, kind: input, shape index: {}]
  %s2 = inlined_call_operand.vmem [shape: f32[1,128], index: 2, kind: input, shape index: {}]
  %s3 = inlined_call_operand.vmem [shape: f32[2,128], index: 3, kind: output, shape index: {}]
  %s4 = sld [smem:[#allocation0]]
  $region22: #{sinusoidal_embedding.1} parent=0
    _
  %s6 = ssub.s32 1, %s4
  %s7 = scalar_select 0, %s6, %s4
  // Predicated region
  $region2: #{sinusoidal_embedding.1} parent=0 // pred_check
    _
  $region3: #{sinusoidal_embedding.1} parent=0 // pred_check_branch
    %9 = sbr.rel (0) target = $region5
  $region4: #{sinusoidal_embedding.1} parent=0 // pred_region
    _
  $region5: #{sinusoidal_embedding.1} parent=0 // pred_fallthru
    _
  // Predicated region
  $region6: #{sinusoidal_embedding.1} parent=0 // pred_check
    _
  $region7: #{sinusoidal_embedding.1} parent=0 // pred_check_branch
    %11 = sbr.rel (0) target = $region9
  $region8: #{sinusoidal_embedding.1} parent=0 // pred_region
    _
  $region9: #{sinusoidal_embedding.1} parent=0 // pred_fallthru
    _
  // Predicated region
  $region10: #{sinusoidal_embedding.1} parent=0 // pred_check
    _
  $region11: #{sinusoidal_embedding.1} parent=0 // pred_check_branch
    %13 = sbr.rel (0) target = $region13
  $region12: #{sinusoidal_embedding.1} parent=0 // pred_region
    _
  $region13: #{sinusoidal_embedding.1} parent=0 // pred_fallthru
    _
  %v14 = vld [vmem:[%s0] sm:$0x3]
  %v15 = vld [vmem:[%s1] sm:$0xf]
  %17 = vset.pattern.permute.xlu0 0
  %18 = vperm.xlu0 %17, %v14
  %v19 = vpop.permute.xlu0 %18
  %v21 = vlaneseq
  %v22 = vshrl.u32 %v21, 7
  %v23 = vsub.s32 0, %v22
  %v24 = vrot.slane %v15, %v23
  %v25 = vmul.f32 %v19, %v24
  %26 = vset.pattern.permute.xlu0 1
  %27 = vperm.xlu0 %26, %v14
  %v28 = vpop.permute.xlu0 %27
  %v30 = vlaneseq
  %v31 = vshrl.u32 %v30, 7
  %v32 = vsub.s32 1, %v31
  %v33 = vrot.slane %v15, %v32
  %v34 = vmul.f32 %v28, %v33
  %v35 = vadd.f32 %v25, %v34
  %36 = vset.pattern.permute.xlu0 2
  %37 = vperm.xlu0 %36, %v14
  %v38 = vpop.permute.xlu0 %37
  %v40 = vlaneseq
  %v41 = vshrl.u32 %v40, 7
  %v42 = vsub.s32 2, %v41
  %v43 = vrot.slane %v15, %v42
  %v44 = vmul.f32 %v38, %v43
  %v45 = vadd.f32 %v35, %v44
  %46 = vset.pattern.permute.xlu0 3
  %47 = vperm.xlu0 %46, %v14
  %v48 = vpop.permute.xlu0 %47
  %v50 = vlaneseq
  %v51 = vshrl.u32 %v50, 7
  %v52 = vsub.s32 3, %v51
  %v53 = vrot.slane %v15, %v52
  %v54 = vmul.f32 %v48, %v53
  %v55 = vadd.f32 %v45, %v54
  %v56 = vld [vmem:[%s2] sm:$0x1]
  %v58 = vlaneseq
  %v59 = vshrl.u32 %v58, 7
  %v60 = vsub.s32 0, %v59
  %v61 = vrot.slane %v56, %v60
  %v63 = vadd.f32 %v55, %v61
  %v64 = vand.u32 2147483647, %v63
  %vm65 = vcmp.le.f32.partialorder %v64, 0.7853982
  %vm66 = vcmp.lt.s32.totalorder %v63, 0
  %v67 = vand.u32 %v63, 2139095040
  %v68 = vshrl.u32 %v67, 23
  %v69 = vsub.s32 %v68, 127
  %v70 = vand.u32 2147483647, %v63
  %v71 = vand.u32 %v70, 8388607
  %v72 = vor.u32 %v71, 8388608
  %v73 = vsub.s32 0, %v72
  %v74 = vadd.s32 %v69, 1
  %vm75 = vcmp.gt.s32.totalorder %v74, 0
  %v76 = vsel %vm75, %v74, 0
  %v77 = vshrl.u32 %v76, 5
  %v78 = vand.u32 %v76, 31
  %v79 = vsub.s32 32, %v78
  %v80 = vshrl.u32 683565275, %v79
  %v81 = vshll.u32 683565275, %v78
  %v82 = vshrl.u32 2475754826, %v79
  %v83 = vor.u32 %v81, %v82
  %v84 = vshll.u32 2475754826, %v78
  %v85 = vshrl.u32 2131351028, %v79
  %v86 = vor.u32 %v84, %v85
  %v87 = vshll.u32 2131351028, %v78
  %v88 = vshrl.u32 2102212464, %v79
  %v89 = vor.u32 %v87, %v88
  %v90 = vshll.u32 2102212464, %v78
  %v91 = vshrl.u32 920167782, %v79
  %v92 = vor.u32 %v90, %v91
  %v93 = vshll.u32 920167782, %v78
  %v94 = vshrl.u32 1326507024, %v79
  %v95 = vor.u32 %v93, %v94
  %vm96 = vcmp.lt.s32.totalorder %v77, 1
  %vm97 = vcmp.lt.s32.totalorder %v77, 2
  %vm98 = vcmp.lt.s32.totalorder %v77, 3
  %vm99 = vcmp.lt.s32.totalorder %v77, 4
  %v100 = vsel %vm96, %v80, %v83
  %v101 = vsel %vm99, %v89, 2102212464
  %v102 = vsel %vm98, %v86, %v101
  %v103 = vsel %vm97, %v100, %v102
  %v104 = vsel %vm96, %v83, %v86
  %v105 = vsel %vm99, %v92, 920167782
  %v106 = vsel %vm98, %v89, %v105
  %v107 = vsel %vm97, %v104, %v106
  %v108 = vsel %vm96, %v86, %v89
  %v109 = vsel %vm99, %v95, 1326507024
  %v110 = vsel %vm98, %v92, %v109
  %v111 = vsel %vm97, %v108, %v110
  %v112 = vshll.u32 %v72, 8
  %v113 = vmul.u32.u64.compose %v112, %v111
  %v114 = vextract.low.u32 %v113
  %v115 = vextract.high.u32 %v113
  %v116 = vmul.u32.u64.compose %v112, %v107
  %v117 = vextract.low.u32 %v116
  %v118 = vextract.high.u32 %v116
  %v119 = vmul.u32 %v112, %v103
  %v120 = vadd.s32 %v115, %v117
  %vm121 = vc.u32 %v115, %v117
  %v122 = vadd.s32 %v118, 1
  %v123 = vsel %vm121, %v122, %v118
  %v124 = vadd.s32 %v119, %v123
  %v125 = vadd.s32 %v124, 536870912
  %v126 = vshrl.u32 %v125, 30
  %v127 = vshll.u32 %v126, 30
  %v128 = vsub.s32 %v124, %v127
  %vm129 = vcmp.lt.s32.totalorder %v128, 0
  %v130 = vsub.s32 0, %v128
  %v131 = vsel %vm129, %v130, %v128
  %v132 = vclz %v131
  %v133 = vsub.s32 %v132, 2
  %vm134 = vcmp.gt.s32.totalorder 0, %v133
  %v135 = vsel %vm134, 0, %v133
  %v136 = vsub.s32 32, %v135
  %v137 = vshll.u32 %v128, %v135
  %v138 = vshrl.u32 %v120, %v136
  %v139 = vor.u32 %v137, %v138
  %v140 = vsub.s32 4294967266, %v135
  %v141 = vadd.s32 %v140, 127
  %v142 = vshll.u32 %v141, 23
  %v143 = vor.u32 4788187, %v142
  %v144 = vand.u32 2147483647, %v143
  %v146 = vcvt.s32.f32 %v139
  %v147 = vmul.f32 %v146, %v144
  %v148 = vxor.u32 %v147, 2147483648
  %v149 = vsel %vm66, %v148, %v147
  %v150 = vsub.s32 4, %v126
  %v151 = vsel %vm66, %v150, %v126
  %v152 = vsel %vm65, %v63, %v149
  %v153 = vsel %vm65, 0, %v151
  %v154 = vcosq.f32.pop %v152
  %v155 = vsinq.f32.pop %v152
  %vm156 = vweird.f32 %v63
  %v157 = vadd.s32 %v153, 3
  %v158 = vand.u32 %v157, 3
  %vm159 = vcmp.lt.s32.totalorder %v158, 2
  %vm160 = vcmp.eq.s32.totalorder %v158, 0
  %v161 = vxor.u32 %v155, 2147483648
  %v162 = vsel %vm160, %v154, %v161
  %vm163 = vcmp.eq.s32.totalorder %v158, 2
  %v164 = vxor.u32 %v154, 2147483648
  %v165 = vsel %vm163, %v164, %v155
  %v166 = vsel %vm159, %v162, %v165
  %v167 = vsel %vm156, nan, %v166
  %168 = vst [vmem:[%s3] sm:$0x3] %v167
  // Predicated region
  $region14: #{sinusoidal_embedding.1} parent=0 // pred_check
    _
  $region15: #{sinusoidal_embedding.1} parent=0 // pred_check_branch
    %170 = sbr.rel (0) target = $region17
  $region16: #{sinusoidal_embedding.1} parent=0 // pred_region
    _
  $region17: #{sinusoidal_embedding.1} parent=0 // pred_fallthru
    _
  // Predicated region
  $region18: #{sinusoidal_embedding.1} parent=0 // pred_check
    _
  $region19: #{sinusoidal_embedding.1} parent=0 // pred_check_branch
    %172 = sbr.rel (0) target = $region21
  $region20: #{sinusoidal_embedding.1} parent=0 // pred_region
    _
  $region21: #{sinusoidal_embedding.1} parent=0 // pred_fallthru
    _

</llo_original>
